<compile_context>
chip_gen: v7x
topology: tpu7x:2x2x1
jax: 0.10.0
libtpu: 0.0.40
codegen_flags: <defaults>
</compile_context>

<pallas_src>
import math
import functools

import jax
import jax.numpy as jnp
from jax import lax
from jax.experimental import pallas as pl
from jax.experimental.pallas import tpu as pltpu


def _cdiv(a, b):
    return -(-a // b)


def _divnorm_kernel(x_ref, sd_ref, o_ref, *, power, pool_size, num_pools,
                    pools_per_group, chunk):
    """x_ref / o_ref block: (1, C, tile).  sd_ref: (2, num_pools) f32 in SMEM.

    sd_ref[0, p] = sigma_p**power + eps,  sd_ref[1, p] = exp(gamma_p).
    """
    tile = x_ref.shape[-1]
    n_chunks = tile // chunk
    n_groups = _cdiv(num_pools, pools_per_group)

    # Hoist the per-pool SMEM scalars out of the lane-chunk loop.
    sig_p = [sd_ref[0, p] for p in range(num_pools)]   # sigma**power + eps
    gam_p = [sd_ref[1, p] for p in range(num_pools)]   # exp(gamma)

    def process(c0):
        lanes = pl.ds(c0, chunk)
        for g in range(n_groups):
            p_lo = g * pools_per_group
            p_hi = min(num_pools, p_lo + pools_per_group)
            outs = []
            for p in range(p_lo, p_hi):
                r0 = p * pool_size
                # Ref-sliced load of just this pool's rows (sublane-addressable),
                # f32 compute; no block-wide intermediate stays live.
                xg = x_ref[0, r0:r0 + pool_size, lanes].astype(jnp.float32)
                if power == 2:
                    xg_pow = xg * xg                     # one VPU mul
                else:
                    xg_pow = xg ** power                 # static even int power
                pooled = jnp.sum(xg_pow, axis=0, keepdims=True)          # (1, chunk)
                # x**p * exp(gamma) / (pool_sum + sigma**p + eps) as EUP recip + muls
                scale = gam_p[p] * pl.reciprocal(pooled + sig_p[p], approx=True)
                outs.append((xg_pow * scale).astype(o_ref.dtype))
            g_r0 = p_lo * pool_size
            g_rows = (p_hi - p_lo) * pool_size
            block = outs[0] if len(outs) == 1 else jnp.concatenate(outs, axis=0)
            # One dense, sublane-aligned store per group of pools.
            o_ref[0, g_r0:g_r0 + g_rows, lanes] = block

    if n_chunks == 1:
        process(0)
    else:
        def body(ci, carry):
            process(pl.multiple_of(ci * chunk, chunk))
            return carry
        lax.fori_loop(0, n_chunks, body, 0)


def _choose_tiling(HW, C, N, itemsize, *, max_block_bytes=8 << 20, lane_chunk=2048):
    """Lane-dense spatial tile (multiple of 128), its count, and the in-kernel
    lane-chunk width (chunk always divides tile)."""
    rnd = lambda v, m: _cdiv(v, m) * m
    hw128 = rnd(HW, 128)
    # Largest lane tile whose (C, tile) block fits the per-block byte budget.
    cap = max(128, (max_block_bytes // (C * itemsize)) // 128 * 128)
    chunk = min(lane_chunk, cap)
    if hw128 <= chunk:
        tile = hw128
        chunk = tile
    else:
        tile = min(rnd(hw128, chunk), (cap // chunk) * chunk)
    num_tiles = _cdiv(HW, tile)
    # v7x megacore: prefer an even total number of 'parallel' grid steps.
    if (N * num_tiles) % 2 == 1 and tile > 128:
        half = rnd(_cdiv(tile, 2), chunk if tile > chunk else 128)
        nt2 = _cdiv(HW, half)
        if (N * nt2) % 2 == 0:
            tile, num_tiles = half, nt2
            chunk = min(chunk, tile)
    return tile, num_tiles, chunk


def divisive_norm_heeger_pallas(x, gamma, sigma, *, power, pool_size, num_pools, args):
    """Exact (up to fp / approx-reciprocal) replica of divisive_normalization_Heeger."""
    N, C, H, W = x.shape
    assert C == pool_size * num_pools
    eps = float(args['eps']) if 'eps' in args else 1e-8

    # TODO(synk): the odd-`power` branch of the torch reference (`x = torch.abs(x)`)
    # references an undefined variable and cannot be reproduced; even powers only.
    assert power % 2 == 0, "only even power supported (reference is buggy for odd power)"

    # ---- parameter glue (same op order as the torch reference) ----
    if args['single_sigma']:
        sig_term = jnp.broadcast_to(sigma ** power, (num_pools,))
    else:
        if args['normalize_sigma']:
            sigma = sigma ** power / jnp.sum(sigma ** power)
        sig_term = sigma ** power
    if args['single_gamma']:
        den = jnp.broadcast_to(jnp.exp(gamma), (num_pools,))
    else:
        if args['normalize_gamma']:
            gamma = gamma ** power / jnp.sum(sigma ** power)  # (sic) divides by sigma sum, as in reference
        den = jnp.exp(gamma)

    # Single (2, num_pools) SMEM operand: row 0 = sigma**p + eps, row 1 = exp(gamma).
    sig_den = jnp.stack([sig_term.astype(jnp.float32) + jnp.float32(eps),
                         den.astype(jnp.float32)], axis=0)

    # ---- lane-dense tiling over the flattened spatial axis (no padding pass) ----
    HW = H * W
    itemsize = x.dtype.itemsize
    tile, num_tiles, chunk = _choose_tiling(HW, C, N, itemsize)

    # Fuse stores to full sublane tiles: 8 rows for 4-byte, 16 for 2-byte dtypes.
    sub_rows = max(8, 32 // max(1, itemsize))
    if pool_size >= sub_rows:
        pools_per_group = 1
    else:
        pools_per_group = max(1, min(num_pools, sub_rows // pool_size))

    xr = x.reshape(N, C, HW)
    kernel = functools.partial(
        _divnorm_kernel, power=int(power), pool_size=pool_size,
        num_pools=num_pools, pools_per_group=pools_per_group, chunk=chunk)

    out = pl.pallas_call(
        kernel,
        out_shape=jax.ShapeDtypeStruct((N, C, HW), x.dtype),
        grid_spec=pltpu.PrefetchScalarGridSpec(
            num_scalar_prefetch=0,
            grid=(N, num_tiles),
            in_specs=[
                pl.BlockSpec((1, C, tile), lambda b, t: (b, 0, t)),
                pl.BlockSpec(memory_space=pltpu.MemorySpace.SMEM),
            ],
            out_specs=pl.BlockSpec((1, C, tile), lambda b, t: (b, 0, t)),
        ),
        compiler_params=pltpu.CompilerParams(
            dimension_semantics=("parallel", "parallel"),
            vmem_limit_bytes=48 * 1024 * 1024),
    )(xr, sig_den)

    return out.reshape(N, C, H, W)


class DivisiveNormHeegerPallas:
    """JAX/Pallas port of the torch DivisiveNormHeeger module (forward only)."""

    def __init__(self, output_channels=16, args_divnorm=None):
        self.args = args_divnorm
        self.power = args_divnorm['power']
        p = args_divnorm['p']
        self.pool_size = 2 ** int(p * math.log2(output_channels))
        self.num_pools = output_channels // self.pool_size
        g0 = float(args_divnorm['gamma'])
        s0 = float(args_divnorm['sigma'])
        # deterministic parameter init (same values as torch __init__)
        if args_divnorm['single_gamma']:
            self.gamma = jnp.array([g0], jnp.float32)
        else:
            self.gamma = jnp.array([g0] * self.num_pools, jnp.float32)
        if args_divnorm['single_sigma']:
            self.sigma = jnp.array([s0], jnp.float32)
        else:
            self.sigma = jnp.array([s0] * self.num_pools, jnp.float32)

    def __call__(self, x):
        return divisive_norm_heeger_pallas(
            x, self.gamma, self.sigma,
            power=self.power, pool_size=self.pool_size,
            num_pools=self.num_pools, args=self.args)


def _reference_jax(x, gamma, sigma, power, pool_size, num_pools, args):
    """Pure-JAX mirror of the torch math, for correctness checking."""
    eps = args.get('eps', 1e-8)
    N, C, H, W = x.shape
    xp = x ** power                                               # (N,C,H,W)
    div = xp.reshape(N, num_pools, pool_size, H, W).sum(axis=2)   # (N,num_pools,H,W)
    if args['single_sigma']:
        sig_term = jnp.broadcast_to(sigma ** power, (num_pools,))
    else:
        if args['normalize_sigma']:
            sigma = sigma ** power / jnp.sum(sigma ** power)
        sig_term = sigma ** power
    if args['single_gamma']:
        den = jnp.broadcast_to(jnp.exp(gamma), (num_pools,))
    else:
        if args['normalize_gamma']:
            gamma = gamma ** power / jnp.sum(sigma ** power)
        den = jnp.exp(gamma)
    num = div + sig_term[None, :, None, None] + eps
    din = num / den[None, :, None, None]                          # (N,num_pools,H,W)
    din_exp = jnp.repeat(din, pool_size, axis=1)                  # (N,C,H,W)
    return xp / din_exp


if __name__ == "__main__":
    args_divnorm = dict(
        power=2, gamma=0.5, sigma=0.1, p=0.5,
        fix_all=False, fix_gamma=False, fix_sigma=False,
        single_gamma=False, single_sigma=False,
        normalize_gamma=False, normalize_sigma=False,
        eps=1e-8,
    )
    C = 16  # output_channels -> pool_size = 2**int(0.5*log2(16)) = 4, num_pools = 4
    mod = DivisiveNormHeegerPallas(output_channels=C, args_divnorm=args_divnorm)

    key = jax.random.PRNGKey(0)
    k1, k2 = jax.random.split(key)

    # main check: 128-aligned spatial size
    x = jax.random.normal(k1, (2, C, 16, 16), dtype=jnp.float32)
    out = jax.block_until_ready(mod(x))
    ref = _reference_jax(x, mod.gamma, mod.sigma, mod.power,
                         mod.pool_size, mod.num_pools, args_divnorm)
    assert out.shape == x.shape
    # Tolerance is relaxed vs exact math because the in-kernel scale uses the EUP
    # approximate reciprocal; semantic bugs would show up as O(1) errors.
    assert jnp.allclose(out, ref, rtol=5e-3, atol=1e-5), "mismatch vs reference"

    # second check: non-128-aligned spatial size exercises the ragged edge block
    x2 = jax.random.normal(k2, (2, C, 10, 10), dtype=jnp.float32)
    out2 = jax.block_until_ready(mod(x2))
    ref2 = _reference_jax(x2, mod.gamma, mod.sigma, mod.power,
                          mod.pool_size, mod.num_pools, args_divnorm)
    assert out2.shape == x2.shape
    assert jnp.allclose(out2, ref2, rtol=5e-3, atol=1e-5), "mismatch vs reference (ragged)"

    print("KERNEL_OK")
</pallas_src>

<mosaic_0001>
module attributes {stable_mosaic.version = 11 : i64} {
  func.func @_divnorm_kernel(%arg0: i32, %arg1: i32, %arg2: memref<1x16x256xf32, #tpu.memory_space<vmem>>, %arg3: memref<2x4xf32, #tpu.memory_space<smem>>, %arg4: memref<1x16x256xf32, #tpu.memory_space<vmem>>) attributes {dimension_semantics = [#tpu.dimension_semantics<parallel>, #tpu.dimension_semantics<parallel>], iteration_bounds = array<i64: 2, 1>, scalar_prefetch = 0 : i64, scratch_operands = 0 : i64, tpu.core_type = #tpu.core_type<tc>, window_params = [{transform_indices = @transform_0, window_bounds = array<i64: 1, 16, 256>}, {transform_indices = @transform_1, window_bounds = array<i64: 2, 4>}, {transform_indices = @transform_2, window_bounds = array<i64: 1, 16, 256>}]} {
    %c0 = arith.constant 0 : index
    %c0_0 = arith.constant 0 : index
    %0 = memref.load %arg3[%c0, %c0_0] : memref<2x4xf32, #tpu.memory_space<smem>>
    %c0_1 = arith.constant 0 : index
    %c1 = arith.constant 1 : index
    %1 = memref.load %arg3[%c0_1, %c1] : memref<2x4xf32, #tpu.memory_space<smem>>
    %c0_2 = arith.constant 0 : index
    %c2 = arith.constant 2 : index
    %2 = memref.load %arg3[%c0_2, %c2] : memref<2x4xf32, #tpu.memory_space<smem>>
    %c0_3 = arith.constant 0 : index
    %c3 = arith.constant 3 : index
    %3 = memref.load %arg3[%c0_3, %c3] : memref<2x4xf32, #tpu.memory_space<smem>>
    %c1_4 = arith.constant 1 : index
    %c0_5 = arith.constant 0 : index
    %4 = memref.load %arg3[%c1_4, %c0_5] : memref<2x4xf32, #tpu.memory_space<smem>>
    %c1_6 = arith.constant 1 : index
    %c1_7 = arith.constant 1 : index
    %5 = memref.load %arg3[%c1_6, %c1_7] : memref<2x4xf32, #tpu.memory_space<smem>>
    %c1_8 = arith.constant 1 : index
    %c2_9 = arith.constant 2 : index
    %6 = memref.load %arg3[%c1_8, %c2_9] : memref<2x4xf32, #tpu.memory_space<smem>>
    %c1_10 = arith.constant 1 : index
    %c3_11 = arith.constant 3 : index
    %7 = memref.load %arg3[%c1_10, %c3_11] : memref<2x4xf32, #tpu.memory_space<smem>>
    %c0_12 = arith.constant 0 : index
    %c0_13 = arith.constant 0 : index
    %c0_14 = arith.constant 0 : index
    %8 = vector.load %arg2[%c0_12, %c0_13, %c0_14] : memref<1x16x256xf32, #tpu.memory_space<vmem>>, vector<1x4x256xf32>
    %9 = vector.shape_cast %8 : vector<1x4x256xf32> to vector<4x256xf32>
    %10 = arith.mulf %9, %9 : vector<4x256xf32>
    %cst = arith.constant dense<0.000000e+00> : vector<256xf32>
    %11 = vector.multi_reduction <add>, %10, %cst [0] : vector<4x256xf32> to vector<256xf32>
    %12 = vector.shape_cast %11 : vector<256xf32> to vector<1x256xf32>
    %13 = vector.broadcast %0 : f32 to vector<1x256xf32>
    %14 = arith.addf %12, %13 : vector<1x256xf32>
    %15 = tpu.reciprocal %14 {approx = true} : vector<1x256xf32> -> vector<1x256xf32>
    %16 = vector.broadcast %4 : f32 to vector<1x256xf32>
    %17 = arith.mulf %16, %15 : vector<1x256xf32>
    %18 = vector.broadcast %17 : vector<1x256xf32> to vector<4x256xf32>
    %19 = arith.mulf %10, %18 : vector<4x256xf32>
    %c0_15 = arith.constant 0 : index
    %c4 = arith.constant 4 : index
    %c0_16 = arith.constant 0 : index
    %20 = vector.load %arg2[%c0_15, %c4, %c0_16] : memref<1x16x256xf32, #tpu.memory_space<vmem>>, vector<1x4x256xf32>
    %21 = vector.shape_cast %20 : vector<1x4x256xf32> to vector<4x256xf32>
    %22 = arith.mulf %21, %21 : vector<4x256xf32>
    %cst_17 = arith.constant dense<0.000000e+00> : vector<256xf32>
    %23 = vector.multi_reduction <add>, %22, %cst_17 [0] : vector<4x256xf32> to vector<256xf32>
    %24 = vector.shape_cast %23 : vector<256xf32> to vector<1x256xf32>
    %25 = vector.broadcast %1 : f32 to vector<1x256xf32>
    %26 = arith.addf %24, %25 : vector<1x256xf32>
    %27 = tpu.reciprocal %26 {approx = true} : vector<1x256xf32> -> vector<1x256xf32>
    %28 = vector.broadcast %5 : f32 to vector<1x256xf32>
    %29 = arith.mulf %28, %27 : vector<1x256xf32>
    %30 = vector.broadcast %29 : vector<1x256xf32> to vector<4x256xf32>
    %31 = arith.mulf %22, %30 : vector<4x256xf32>
    %32 = tpu.concatenate %19, %31 in 0 : vector<4x256xf32>, vector<4x256xf32> -> vector<8x256xf32>
    %c0_18 = arith.constant 0 : index
    %c0_19 = arith.constant 0 : index
    %c0_20 = arith.constant 0 : index
    %33 = vector.load %arg4[%c0_18, %c0_19, %c0_20] : memref<1x16x256xf32, #tpu.memory_space<vmem>>, vector<1x8x256xf32>
    %34 = vector.shape_cast %33 : vector<1x8x256xf32> to vector<8x256xf32>
    %35 = vector.shape_cast %32 : vector<8x256xf32> to vector<1x8x256xf32>
    tpu.vector_store %arg4[%c0_18, %c0_19, %c0_20], %35 {strides = array<i32>} : memref<1x16x256xf32, #tpu.memory_space<vmem>>, vector<1x8x256xf32>,
    %c0_21 = arith.constant 0 : index
    %c8 = arith.constant 8 : index
    %c0_22 = arith.constant 0 : index
    %36 = vector.load %arg2[%c0_21, %c8, %c0_22] : memref<1x16x256xf32, #tpu.memory_space<vmem>>, vector<1x4x256xf32>
    %37 = vector.shape_cast %36 : vector<1x4x256xf32> to vector<4x256xf32>
    %38 = arith.mulf %37, %37 : vector<4x256xf32>
    %cst_23 = arith.constant dense<0.000000e+00> : vector<256xf32>
    %39 = vector.multi_reduction <add>, %38, %cst_23 [0] : vector<4x256xf32> to vector<256xf32>
    %40 = vector.shape_cast %39 : vector<256xf32> to vector<1x256xf32>
    %41 = vector.broadcast %2 : f32 to vector<1x256xf32>
    %42 = arith.addf %40, %41 : vector<1x256xf32>
    %43 = tpu.reciprocal %42 {approx = true} : vector<1x256xf32> -> vector<1x256xf32>
    %44 = vector.broadcast %6 : f32 to vector<1x256xf32>
    %45 = arith.mulf %44, %43 : vector<1x256xf32>
    %46 = vector.broadcast %45 : vector<1x256xf32> to vector<4x256xf32>
    %47 = arith.mulf %38, %46 : vector<4x256xf32>
    %c0_24 = arith.constant 0 : index
    %c12 = arith.constant 12 : index
    %c0_25 = arith.constant 0 : index
    %48 = vector.load %arg2[%c0_24, %c12, %c0_25] : memref<1x16x256xf32, #tpu.memory_space<vmem>>, vector<1x4x256xf32>
    %49 = vector.shape_cast %48 : vector<1x4x256xf32> to vector<4x256xf32>
    %50 = arith.mulf %49, %49 : vector<4x256xf32>
    %cst_26 = arith.constant dense<0.000000e+00> : vector<256xf32>
    %51 = vector.multi_reduction <add>, %50, %cst_26 [0] : vector<4x256xf32> to vector<256xf32>
    %52 = vector.shape_cast %51 : vector<256xf32> to vector<1x256xf32>
    %53 = vector.broadcast %3 : f32 to vector<1x256xf32>
    %54 = arith.addf %52, %53 : vector<1x256xf32>
    %55 = tpu.reciprocal %54 {approx = true} : vector<1x256xf32> -> vector<1x256xf32>
    %56 = vector.broadcast %7 : f32 to vector<1x256xf32>
    %57 = arith.mulf %56, %55 : vector<1x256xf32>
    %58 = vector.broadcast %57 : vector<1x256xf32> to vector<4x256xf32>
    %59 = arith.mulf %50, %58 : vector<4x256xf32>
    %60 = tpu.concatenate %47, %59 in 0 : vector<4x256xf32>, vector<4x256xf32> -> vector<8x256xf32>
    %c0_27 = arith.constant 0 : index
    %c8_28 = arith.constant 8 : index
    %c0_29 = arith.constant 0 : index
    %61 = vector.load %arg4[%c0_27, %c8_28, %c0_29] : memref<1x16x256xf32, #tpu.memory_space<vmem>>, vector<1x8x256xf32>
    %62 = vector.shape_cast %61 : vector<1x8x256xf32> to vector<8x256xf32>
    %63 = vector.shape_cast %60 : vector<8x256xf32> to vector<1x8x256xf32>
    tpu.vector_store %arg4[%c0_27, %c8_28, %c0_29], %63 {strides = array<i32>} : memref<1x16x256xf32, #tpu.memory_space<vmem>>, vector<1x8x256xf32>,
    return
  }
  func.func @transform_0(%arg0: i32, %arg1: i32) -> (i32, i32, i32) {
    %c0_i32 = arith.constant 0 : i32
    %c0_i32_0 = arith.constant 0 : i32
    return %arg0, %c0_i32, %arg1 : i32, i32, i32
  }
  func.func @transform_1(%arg0: i32, %arg1: i32) -> (i32, i32) {
    %c0_i32 = arith.constant 0 : i32
    %c0_i32_0 = arith.constant 0 : i32
    %c0_i32_1 = arith.constant 0 : i32
    return %c0_i32, %c0_i32_0 : i32, i32
  }
  func.func @transform_2(%arg0: i32, %arg1: i32) -> (i32, i32, i32) {
    %c0_i32 = arith.constant 0 : i32
    %c0_i32_0 = arith.constant 0 : i32
    return %arg0, %c0_i32, %arg1 : i32, i32, i32
  }
}

</mosaic_0001>

<llo_original>
// kernel: tpu_custom_call.1
$region0: #{tpu_custom_call.1}
  #allocation0 [shape = 'u32[]', space=smem, size = 0x4, offset = 0x4, fixed_abs, tag = 'smem constant byte address 0x4 - core index']
  #allocation1 [shape = 'u32[144,128]{1,0:T(1,128)}', space=vmem, size = 0x12000, scoped, tag = 'internal scratch']
  %s0 = inlined_call_operand.hbm [shape: f32[2,16,256], index: 0, kind: input, shape index: {}]
  %s1 = inlined_call_operand.vmem [shape: f32[2,4], index: 1, kind: input, shape index: {}]
  %s2 = inlined_call_operand.hbm [shape: f32[2,16,256], index: 2, kind: output, shape index: {}]
  %s3 = sld [smem:[#allocation0]]
  $region49: #{tpu_custom_call.1} parent=0
    _
  %s5 = ssub.s32 1, %s3
  %s6 = scalar_select 0, %s5, %s3
  $region1: #{tpu_custom_call.1} parent=0
    #allocation2 [shape = 'u8[32768]{0}', space=vmem, size = 0x8000, scoped, tag = 'input window, operand 0']
    #allocation3 [shape = 's32[2]{0}', space=sflag, size = 0x8, scoped, tag = 'scoped memory for tpu_custom_call.1']
    #allocation4 [shape = 's32[2]{0}', space=sflag, size = 0x8, scoped, tag = 'scoped memory for tpu_custom_call.1']
    #allocation5 [shape = 's32[2]{0}', space=sflag, size = 0x8, scoped, tag = 'scoped memory for tpu_custom_call.1']
    #allocation6 [shape = 'u8[1024]{0}', space=smem, size = 0x400, scoped, tag = 'input window, operand 1, single buffered']
    #allocation7 [shape = 'u8[32768]{0}', space=vmem, size = 0x8000, scoped, tag = 'output window, operand 0']
    %7 = vsyncpa [#allocation3], 0
    %s8 = scalar_lea.sflag [#allocation3], 1
    %9 = vsyncpa %s8, 0
    %10 = vsyncpa [#allocation5], 0
    %11 = vsyncpa [#allocation4], 0
    %s12 = scalar_lea.sflag [#allocation4], 1
    %13 = vsyncpa %s12, 0
    loop: start=0, step=1, limit=4
    $region2: #{tpu_custom_call.1} parent=1 // loop_pre_header
      _
    $region3: #{tpu_custom_call.1} parent=1 // loop_header
      %s15 = sphi 0, %s19
      %p16 = scmp.ge.s32.totalorder %s15, 4
      %s22 = sphi 0, %s34
      %s23 = sphi 0, %s30
      %s24 = sphi 0, %s22
      %s25 = sphi 0, %s23
      %s26 = sphi 0, %s24
      %s27 = sphi 0, %s25
      %s39 = sphi 0, %s41
      %s42 = sphi 0, %s39
      %s43 = sphi 0, %s42
      %s59 = sphi 0, %s43
      %s63 = sphi 0, %s63
      %s65 = sphi 0, %s63
      %s66 = sphi 0, %s65
      %s80 = sphi 0, %s66
      %s88 = sphi 0, %s90
      %s91 = sphi 0, %s88
      %s92 = sphi 0, %s91
      %s108 = sphi 0, %s92
    $region4: #{tpu_custom_call.1} parent=1 // loop_header_branch
      %18 = sbr.rel (%p16) target = $region8
    $region5: #{tpu_custom_call.1} parent=1 // loop_body
      %s20 = ssub.s32 %s15, 1
      %s21 = ssub.s32 %s15, 2
      %s28 = sadd.s32 1, %s23
      %p29 = scmp.ge.s32.totalorder %s28, 1
      %s30 = scalar_select %p29, 0, %s28
      %s31 = sadd.s32 1, %s22
      %s32 = scalar_select %p29, %s31, %s22
      %p33 = scmp.ge.s32.totalorder %s32, 2
      %s34 = scalar_select %p33, 0, %s32
      %s35 = ssub.s32 %s22, %s34
      %s36 = ssub.s32 %s23, %s30
      %s37 = sor.u32 %s35, %s36
      %p38 = scmp.eq.s32.totalorder %s37, 0
      %s40 = sadd.s32 %s39, 1
      %s41 = scalar_select %p38, %s39, %s40
      %p44 = pneg %p38
      %p45 = scmp.eq.s32.totalorder %s15, 1
      %p46 = por %p44, %p45
      %p47 = scmp.ne.s32.totalorder %s39, %s42
      %p48 = scmp.eq.s32.totalorder %s15, 0
      %p49 = por %p47, %p48
      %p50 = scmp.ne.s32.totalorder %s39, %s42
      %p51 = scmp.eq.s32.totalorder %s20, 1
      %p52 = por %p50, %p51
      %p53 = scmp.ne.s32.totalorder %s42, %s43
      %p54 = scmp.eq.s32.totalorder %s20, 0
      %p55 = por %p53, %p54
      %p56 = scmp.ne.s32.totalorder %s42, %s43
      %p57 = scmp.eq.s32.totalorder %s21, 1
      %p58 = por %p56, %p57
      %p60 = scmp.ne.s32.totalorder %s43, %s59
      %p61 = scmp.eq.s32.totalorder %s21, 0
      %p62 = por %p60, %p61
      %s64 = sadd.s32 %s63, 1
      %p67 = scmp.eq.s32.totalorder %s15, 1
      %p68 = scmp.ne.s32.totalorder %s63, %s65
      %p69 = scmp.eq.s32.totalorder %s15, 0
      %p70 = por %p68, %p69
      %p71 = scmp.ne.s32.totalorder %s63, %s65
      %p72 = scmp.eq.s32.totalorder %s20, 1
      %p73 = por %p71, %p72
      %p74 = scmp.ne.s32.totalorder %s65, %s66
      %p75 = scmp.eq.s32.totalorder %s20, 0
      %p76 = por %p74, %p75
      %p77 = scmp.ne.s32.totalorder %s65, %s66
      %p78 = scmp.eq.s32.totalorder %s21, 1
      %p79 = por %p77, %p78
      %p81 = scmp.ne.s32.totalorder %s66, %s80
      %p82 = scmp.eq.s32.totalorder %s21, 0
      %p83 = por %p81, %p82
      %s84 = ssub.s32 %s22, %s34
      %s85 = ssub.s32 %s23, %s30
      %s86 = sor.u32 %s84, %s85
      %p87 = scmp.eq.s32.totalorder %s86, 0
      %s89 = sadd.s32 %s88, 1
      %s90 = scalar_select %p87, %s88, %s89
      %p93 = pneg %p87
      %p94 = scmp.eq.s32.totalorder %s15, 1
      %p95 = por %p93, %p94
      %p96 = scmp.ne.s32.totalorder %s88, %s91
      %p97 = scmp.eq.s32.totalorder %s15, 0
      %p98 = por %p96, %p97
      %p99 = scmp.ne.s32.totalorder %s88, %s91
      %p100 = scmp.eq.s32.totalorder %s20, 1
      %p101 = por %p99, %p100
      %p102 = scmp.ne.s32.totalorder %s91, %s92
      %p103 = scmp.eq.s32.totalorder %s20, 0
      %p104 = por %p102, %p103
      %p105 = scmp.ne.s32.totalorder %s91, %s92
      %p106 = scmp.eq.s32.totalorder %s21, 1
      %p107 = por %p105, %p106
      %p109 = scmp.ne.s32.totalorder %s92, %s108
      %p110 = scmp.eq.s32.totalorder %s21, 0
      %p111 = por %p109, %p110
      %p112 = scmp.le.s32.totalorder 1, %s15
      %p113 = scmp.lt.s32.totalorder %s15, 3
      %p114 = pnand %p112, %p113
      %p115 = pneg %p114
      // Predicated region
      $region9: #{tpu_custom_call.1} parent=5 // pred_check
        _
      $region10: #{tpu_custom_call.1} parent=5 // pred_check_branch
        %117 = sbr.rel (%p114) target = $region12
      $region11: #{tpu_custom_call.1} parent=5 // pred_region
        %s118 = ssub.s32 %s15, 1
        // Predicated region
        $region13: #{tpu_custom_call.1} parent=11 // pred_check
          %p119 = pneg %p76
        $region14: #{tpu_custom_call.1} parent=11 // pred_check_branch
          %121 = sbr.rel (%p119) target = $region16
        $region15: #{tpu_custom_call.1} parent=11 // pred_region
          %s123 = ssub.s32 32, 32
          %124 = vsyncadd [#allocation5], %s123
          %s126 = sshll.u32 %s1, 4
          %s127 = int_to_ptr.vmem [resolvable:$true] %s126
          %129 = dma.vmem_to_smem %s127, 32, [#allocation6], [#allocation5]
        $region16: #{tpu_custom_call.1} parent=11 // pred_fallthru
          _
      $region12: #{tpu_custom_call.1} parent=5 // pred_fallthru
        _
      %p130 = scmp.lt.s32.totalorder %s15, 2
      // Predicated region
      $region17: #{tpu_custom_call.1} parent=5 // pred_check
        %p131 = pneg %p130
      $region18: #{tpu_custom_call.1} parent=5 // pred_check_branch
        %133 = sbr.rel (%p131) target = $region20
      $region19: #{tpu_custom_call.1} parent=5 // pred_region
        // Predicated region
        $region21: #{tpu_custom_call.1} parent=19 // pred_check
          %p134 = pneg %p49
        $region22: #{tpu_custom_call.1} parent=19 // pred_check_branch
          %136 = sbr.rel (%p134) target = $region24
        $region23: #{tpu_custom_call.1} parent=19 // pred_region
          %s137 = sand.u32 %s39, 1
          %s138 = scalar_lea.sflag [#allocation3], %s137
          %s139 = sand.u32 %s39, 1
          %s140 = smul.addr %s139, 32
          %s141 = scalar_lea.vmem [#allocation2], %s140
          %s142 = smul.u32 2, %s23
          %s144 = ssub.s32 512, 512
          %145 = vsyncadd %s138, %s144
          %s146 = smul.addr %s22, 4
          %s147 = sadd.s32 %s142, %s146
          %s148 = smul.addr %s147, 128
          %s149 = scalar_lea.hbm %s0, %s148
          %s150 = sshll.u32 %s141, 4
          %s151 = int_to_ptr.vmem [resolvable:$true] %s150
          %156 = dma.hbm_to_vmem [thread:$0]  %s149, 512, %s151, %s138, 256, 256, 16
        $region24: #{tpu_custom_call.1} parent=19 // pred_fallthru
          _
      $region20: #{tpu_custom_call.1} parent=5 // pred_fallthru
        _
      %p157 = scmp.le.s32.totalorder 1, %s15
      %p158 = scmp.lt.s32.totalorder %s15, 3
      %p159 = pnand %p157, %p158
      %p160 = pneg %p159
      // Predicated region
      $region25: #{tpu_custom_call.1} parent=5 // pred_check
        _
      $region26: #{tpu_custom_call.1} parent=5 // pred_check_branch
        %162 = sbr.rel (%p159) target = $region28
      $region27: #{tpu_custom_call.1} parent=5 // pred_region
        %s163 = ssub.s32 %s15, 1
        %s164 = sand.u32 %s42, 1
        %s165 = scalar_lea.sflag [#allocation3], %s164
        %s166 = sand.u32 %s42, 1
        %s167 = smul.addr %s166, 32
        %s168 = scalar_lea.vmem [#allocation2], %s167
        // Predicated region
        $region29: #{tpu_custom_call.1} parent=27 // pred_check
          %p169 = pneg %p55
        $region30: #{tpu_custom_call.1} parent=27 // pred_check_branch
          %171 = sbr.rel (%p169) target = $region32
        $region31: #{tpu_custom_call.1} parent=27 // pred_region
          %172 = dma.done %s165, 512
        $region32: #{tpu_custom_call.1} parent=27 // pred_fallthru
          _
        // Predicated region
        $region33: #{tpu_custom_call.1} parent=27 // pred_check
          %p173 = pneg %p76
        $region34: #{tpu_custom_call.1} parent=27 // pred_check_branch
          %175 = sbr.rel (%p173) target = $region36
        $region35: #{tpu_custom_call.1} parent=27 // pred_region
          %176 = dma.done [#allocation5], 32
        $region36: #{tpu_custom_call.1} parent=27 // pred_fallthru
          _
        %177 = sfence
        %s178 = sand.u32 %s42, 1
        %s179 = scalar_lea.sflag [#allocation3], %s178
        %s180 = sand.u32 %s42, 1
        %s181 = smul.addr %s180, 32
        %s182 = scalar_lea.vmem [#allocation2], %s181
        %p183 = pneg %p55
        %p184 = pneg %p52
        %p185 = pneg %p76
        %p186 = pneg %p73
        %p187 = pneg %p104
        %p188 = pneg %p101
        %s189 = sand.u32 %s91, 1
        %s190 = scalar_lea.sflag [#allocation4], %s189
        %s191 = sand.u32 %s91, 1
        %s192 = smul.addr %s191, 32
        %s193 = scalar_lea.vmem [#allocation7], %s192
        %s194 = smul.u32 2, %s25
        %s195 = smul.u32 2, %s25
        %s196 = sld [smem:[#allocation6]]
        %s197 = sld [smem:[#allocation6 + $0x1]]
        %s198 = sld [smem:[#allocation6 + $0x2]]
        %s199 = sld [smem:[#allocation6 + $0x3]]
        %s200 = sld [smem:[#allocation6 + $0x80]]
        %s201 = sld [smem:[#allocation6 + $0x81]]
        %s202 = sld [smem:[#allocation6 + $0x82]]
        %s203 = sld [smem:[#allocation6 + $0x83]]
        %v204 = vld [vmem:[%s168] sm:$0xf]
        %v205 = vld [vmem:[%s168 + $0x8] sm:$0xf]
        %v206 = vmul.f32 %v204, %v204
        %v207 = vmul.f32 %v205, %v205
        %vm208 = vcmask 1043456
        %v209 = vsel %vm208, %v206, 0.0
        %v210 = vrot.slane %v209, 4
        %v211 = vadd.f32 %v209, %v210
        %v212 = vrot.slane %v211, 2
        %v213 = vadd.f32 %v211, %v212
        %v214 = vrot.slane %v213, 1
        %v215 = vadd.f32 %v213, %v214
        %v216 = vsel %vm208, %v207, 0.0
        %v217 = vrot.slane %v216, 4
        %v218 = vadd.f32 %v216, %v217
        %v219 = vrot.slane %v218, 2
        %v220 = vadd.f32 %v218, %v219
        %v221 = vrot.slane %v220, 1
        %v222 = vadd.f32 %v220, %v221
        %v223 = vstv %s196
        %v224 = vadd.f32 %v215, %v223
        %v225 = vadd.f32 %v222, %v223
        %v226 = vrcp.pop %v224
        %v227 = vrcp.pop %v225
        %v228 = vstv %s200
        %v229 = vmul.f32 %v228, %v226
        %v230 = vmul.f32 %v228, %v227
        %v231 = vmul.f32 %v206, %v229
        %v232 = vmul.f32 %v207, %v230
        %v233 = vld [vmem:[%s168] sm:$0xf0]
        %v234 = vld [vmem:[%s168 + $0x8] sm:$0xf0]
        %v235 = vmul.f32 %v233, %v233
        %v236 = vmul.f32 %v234, %v234
        %v239 = vrot.slane %v235, 4
        %v240 = vrot.slane %v236, 4
        %v243 = vsel %vm208, %v239, 0.0
        %v244 = vrot.slane %v243, 4
        %v245 = vadd.f32 %v243, %v244
        %v246 = vrot.slane %v245, 2
        %v247 = vadd.f32 %v245, %v246
        %v248 = vrot.slane %v247, 1
        %v249 = vadd.f32 %v247, %v248
        %v250 = vsel %vm208, %v240, 0.0
        %v251 = vrot.slane %v250, 4
        %v252 = vadd.f32 %v250, %v251
        %v253 = vrot.slane %v252, 2
        %v254 = vadd.f32 %v252, %v253
        %v255 = vrot.slane %v254, 1
        %v256 = vadd.f32 %v254, %v255
        %v257 = vstv %s197
        %v258 = vadd.f32 %v249, %v257
        %v259 = vadd.f32 %v256, %v257
        %v260 = vrcp.pop %v258
        %v261 = vrcp.pop %v259
        %v262 = vstv %s201
        %v263 = vmul.f32 %v262, %v260
        %v264 = vmul.f32 %v262, %v261
        %v265 = vmul.f32 %v235, %v263
        %v266 = vmul.f32 %v236, %v264
        %v267 = vsel %vm208, %v231, %v265
        %v268 = vsel %vm208, %v232, %v266
        %269 = vst [vmem:[%s193] sm:$0xff] %v267
        %270 = vst [vmem:[%s193 + $0x8] sm:$0xff] %v268
        %v271 = vld [vmem:[%s168 + $0x10] sm:$0xf]
        %v272 = vld [vmem:[%s168 + $0x18] sm:$0xf]
        %v273 = vmul.f32 %v271, %v271
        %v274 = vmul.f32 %v272, %v272
        %v275 = vsel %vm208, %v273, 0.0
        %v276 = vrot.slane %v275, 4
        %v277 = vadd.f32 %v275, %v276
        %v278 = vrot.slane %v277, 2
        %v279 = vadd.f32 %v277, %v278
        %v280 = vrot.slane %v279, 1
        %v281 = vadd.f32 %v279, %v280
        %v282 = vsel %vm208, %v274, 0.0
        %v283 = vrot.slane %v282, 4
        %v284 = vadd.f32 %v282, %v283
        %v285 = vrot.slane %v284, 2
        %v286 = vadd.f32 %v284, %v285
        %v287 = vrot.slane %v286, 1
        %v288 = vadd.f32 %v286, %v287
        %v289 = vstv %s198
        %v290 = vadd.f32 %v281, %v289
        %v291 = vadd.f32 %v288, %v289
        %v292 = vrcp.pop %v290
        %v293 = vrcp.pop %v291
        %v294 = vstv %s202
        %v295 = vmul.f32 %v294, %v292
        %v296 = vmul.f32 %v294, %v293
        %v297 = vmul.f32 %v273, %v295
        %v298 = vmul.f32 %v274, %v296
        %v299 = vld [vmem:[%s168 + $0x10] sm:$0xf0]
        %v300 = vld [vmem:[%s168 + $0x18] sm:$0xf0]
        %v301 = vmul.f32 %v299, %v299
        %v302 = vmul.f32 %v300, %v300
        %v305 = vrot.slane %v301, 4
        %v306 = vrot.slane %v302, 4
        %v309 = vsel %vm208, %v305, 0.0
        %v310 = vrot.slane %v309, 4
        %v311 = vadd.f32 %v309, %v310
        %v312 = vrot.slane %v311, 2
        %v313 = vadd.f32 %v311, %v312
        %v314 = vrot.slane %v313, 1
        %v315 = vadd.f32 %v313, %v314
        %v316 = vsel %vm208, %v306, 0.0
        %v317 = vrot.slane %v316, 4
        %v318 = vadd.f32 %v316, %v317
        %v319 = vrot.slane %v318, 2
        %v320 = vadd.f32 %v318, %v319
        %v321 = vrot.slane %v320, 1
        %v322 = vadd.f32 %v320, %v321
        %v323 = vstv %s199
        %v324 = vadd.f32 %v315, %v323
        %v325 = vadd.f32 %v322, %v323
        %v326 = vrcp.pop %v324
        %v327 = vrcp.pop %v325
        %v328 = vstv %s203
        %v329 = vmul.f32 %v328, %v326
        %v330 = vmul.f32 %v328, %v327
        %v331 = vmul.f32 %v301, %v329
        %v332 = vmul.f32 %v302, %v330
        %v333 = vsel %vm208, %v297, %v331
        %v334 = vsel %vm208, %v298, %v332
        %335 = vst [vmem:[%s193 + $0x10] sm:$0xff] %v333
        %336 = vst [vmem:[%s193 + $0x18] sm:$0xff] %v334
        %s337 = sand.u32 %s91, 1
        %s338 = scalar_lea.sflag [#allocation4], %s337
        %s339 = sand.u32 %s91, 1
        %s340 = smul.addr %s339, 32
        %s341 = scalar_lea.vmem [#allocation7], %s340
        // Predicated region
        $region37: #{tpu_custom_call.1} parent=27 // pred_check
          %p342 = pneg %p101
        $region38: #{tpu_custom_call.1} parent=27 // pred_check_branch
          %344 = sbr.rel (%p342) target = $region40
        $region39: #{tpu_custom_call.1} parent=27 // pred_region
          %s345 = smul.u32 2, %s25
          %s347 = ssub.s32 512, 512
          %348 = vsyncadd %s338, %s347
          %s349 = smul.addr %s24, 4
          %s350 = sadd.s32 %s345, %s349
          %s351 = smul.addr %s350, 128
          %s352 = scalar_lea.hbm %s2, %s351
          %s353 = sshll.u32 %s341, 4
          %s354 = int_to_ptr.vmem [resolvable:$true] %s353
          %359 = dma.vmem_to_hbm [thread:$0]  %s354, 512, %s352, %s338, 256, 256, 16
        $region40: #{tpu_custom_call.1} parent=27 // pred_fallthru
          _
      $region28: #{tpu_custom_call.1} parent=5 // pred_fallthru
        _
      %p360 = scmp.le.s32.totalorder 2, %s15
      // Predicated region
      $region41: #{tpu_custom_call.1} parent=5 // pred_check
        %p361 = pneg %p360
      $region42: #{tpu_custom_call.1} parent=5 // pred_check_branch
        %363 = sbr.rel (%p361) target = $region44
      $region43: #{tpu_custom_call.1} parent=5 // pred_region
        %s364 = ssub.s32 %s15, 2
        // Predicated region
        $region45: #{tpu_custom_call.1} parent=43 // pred_check
          %p365 = pneg %p107
        $region46: #{tpu_custom_call.1} parent=43 // pred_check_branch
          %367 = sbr.rel (%p365) target = $region48
        $region47: #{tpu_custom_call.1} parent=43 // pred_region
          %s368 = sand.u32 %s92, 1
          %s369 = scalar_lea.sflag [#allocation4], %s368
          %s370 = sand.u32 %s92, 1
          %s371 = smul.addr %s370, 32
          %s372 = scalar_lea.vmem [#allocation7], %s371
          %373 = dma.done %s369, 512
        $region48: #{tpu_custom_call.1} parent=43 // pred_fallthru
          _
      $region44: #{tpu_custom_call.1} parent=5 // pred_fallthru
        _
    $region6: #{tpu_custom_call.1} parent=1 // loop_footer
      %s19 = sadd.s32 1, %s15
    $region7: #{tpu_custom_call.1} parent=1 // loop_footer_branch
      %14 = sbr.rel target = $region3
    $region8: #{tpu_custom_call.1} parent=1 // loop_exit
      _
    %374 = vsyncpa [#allocation3], 1
    %s375 = scalar_lea.sflag [#allocation3], 1
    %376 = vsyncpa %s375, 1
    %377 = vsyncpa [#allocation4], 1
    %s378 = scalar_lea.sflag [#allocation4], 1
    %379 = vsyncpa %s378, 1
    %380 = vsyncpa [#allocation5], 1
    %s381 = scalar_lea.sflag [#allocation5], 1
    %382 = vsyncpa %s381, 1

</llo_original>
